<compile_context>
chip_gen: v7x
topology: tpu7x:2x2x1
jax: 0.10.0
libtpu: 0.0.40
codegen_flags: <defaults>
</compile_context>

<pallas_src>
import numpy as np
import jax
import jax.numpy as jnp
from jax.experimental import pallas as pl
from jax.experimental.pallas import tpu as pltpu

# ---- model hyper-params (small, consistent with the module) ----
B = 2            # batch
S = 8            # seq_length
D = 32           # d_model
H = 2            # num_heads
DK = D // H      # d_k per head
HID = 64         # conv_hidden_dim
EPS = 1e-6

T = B * S                    # flattened token count
PACKW = max(D, HID)          # 64   lane width of the bias/mask pack
WSLAB_W = 4 * D + 2 * HID    # 256  [wq*scale | wk | vproj_0 | vproj_1 | w1 | w2^T]
PACK_ROWS = T + 7            # 23   [mask01 (T rows) ; bh g1 be1 b2 g2 be2 b1]


def encoder_layer_kernel(x_ref, w_ref, pack_ref, out_ref):
    # Single invocation: x holds all B*S tokens.
    x = x_ref[...].astype(jnp.float32)                     # (T, D)
    w = w_ref[...]                                         # (D, WSLAB_W)
    pack = pack_ref[...]                                   # (PACK_ROWS, PACKW)

    mask01 = pack[0:T, 0:T]                                # (T, T) block-diag 0/1
    bh  = pack[T + 0:T + 1, :D]
    g1  = pack[T + 1:T + 2, :D]
    be1 = pack[T + 2:T + 3, :D]
    b2  = pack[T + 3:T + 4, :D]
    g2  = pack[T + 4:T + 5, :D]
    be2 = pack[T + 5:T + 6, :D]
    b1  = pack[T + 6:T + 7, :HID]

    wqkv = w[:, 0:4 * D]                                   # (D, 4D)
    w1   = w[:, 4 * D:4 * D + HID]                         # (D, HID)
    w2t  = w[:, 4 * D + HID:WSLAB_W]                       # (D, HID) == w2^T

    # Fused projection: [q*1/sqrt(dk) | k | v@wh (head 0) | v@wh (head 1)]
    qkv = jnp.dot(x, wqkv, preferred_element_type=jnp.float32)   # (T, 4D)
    q = qkv[:, 0:D]
    k = qkv[:, D:2 * D]

    # --- multi-head self-attention over all B*S tokens, batch-masked ---
    attn = None
    for h in range(H):                                     # static unroll, H=2
        sl = slice(h * DK, (h + 1) * DK)
        qh, kh = q[:, sl], k[:, sl]
        vp = qkv[:, (2 + h) * D:(3 + h) * D]               # (T, D) pre-fused V @ Wh
        s = jax.lax.dot_general(qh, kh, (((1,), (1,)), ((), ())),
                                preferred_element_type=jnp.float32)   # (T, T)
        e = jnp.exp(s - jnp.max(s, axis=-1, keepdims=True)) * mask01
        a = e / jnp.sum(e, axis=-1, keepdims=True)         # exact denominator
        hv = jnp.dot(a, vp, preferred_element_type=jnp.float32)       # (T, D)
        attn = hv if attn is None else attn + hv
    attn = attn + bh

    def layernorm(y, g, b):
        mu = jnp.mean(y, axis=-1, keepdims=True)
        var = jnp.mean((y - mu) ** 2, axis=-1, keepdims=True)
        return (y - mu) * jax.lax.rsqrt(var + EPS) * g + b

    out1 = layernorm(x + attn, g1, be1)                    # (T, D)

    # --- "CNN" (MLP) ---
    hid = jnp.dot(out1, w1, preferred_element_type=jnp.float32) + b1
    hid = jnp.maximum(hid, 0.0)
    cnn = jax.lax.dot_general(hid, w2t, (((1,), (1,)), ((), ())),
                              preferred_element_type=jnp.float32) + b2

    out2 = layernorm(out1 + cnn, g2, be2)
    out_ref[...] = out2.astype(out_ref.dtype)


def prepare_params(params):
    """One-time wrapper-side packing (hoisted out of the per-call path)."""
    (wq, wk, wv, wh, bh, w1, b1, w2, b2, g1, be1, g2, be2) = params
    hp = jax.lax.Precision.HIGHEST
    scale = 1.0 / np.sqrt(DK)

    # Pre-fuse per-head output projection into the V weights.
    vproj = [jnp.dot(wv[:, h * DK:(h + 1) * DK], wh[h * DK:(h + 1) * DK, :],
                     precision=hp) for h in range(H)]                  # H x (D, D)
    wslab = jnp.concatenate([wq * scale, wk] + vproj + [w1, w2.T], axis=1)  # (D, 256)

    # Block-diagonal (per-batch) attention mask for the flattened tokens.
    rb = jnp.arange(T, dtype=jnp.int32) // S
    mask01 = (rb[:, None] == rb[None, :]).astype(jnp.float32)          # (T, T)

    def pad_row(v):                                                    # (1,n)->(1,PACKW)
        return jnp.pad(v, ((0, 0), (0, PACKW - v.shape[1])))

    pack = jnp.concatenate(
        [jnp.pad(mask01, ((0, 0), (0, PACKW - T))),
         pad_row(bh), pad_row(g1), pad_row(be1),
         pad_row(b2), pad_row(g2), pad_row(be2), pad_row(b1)], axis=0)  # (23, 64)
    return wslab, pack


def encoder_layer(x, wslab, pack):
    Bv, Sv, Dv = x.shape
    assert (Bv, Sv, Dv) == (B, S, D)
    x_flat = x.reshape(T, D)

    full = lambda shape: pl.BlockSpec(shape, lambda i: (0,) * len(shape))

    flops = (2 * T * D * 4 * D         # fused qkv / vproj matmul
             + H * 2 * T * T * DK      # attention scores
             + H * 2 * T * T * D       # a @ vproj
             + 2 * T * D * HID         # mlp layer 1
             + 2 * T * HID * D)        # mlp layer 2
    cost = pl.CostEstimate(
        flops=flops,
        transcendentals=H * T * T + 2 * T,
        bytes_accessed=4 * (T * D + D * WSLAB_W + PACK_ROWS * PACKW + T * D))

    out_flat = pl.pallas_call(
        encoder_layer_kernel,
        out_shape=jax.ShapeDtypeStruct((T, D), x.dtype),
        grid=(1,),
        in_specs=[full((T, D)),                # x (flattened tokens)
                  full((D, WSLAB_W)),          # packed weight slab
                  full((PACK_ROWS, PACKW))],   # mask + biases + LN params
        out_specs=full((T, D)),
        compiler_params=pltpu.CompilerParams(dimension_semantics=("arbitrary",)),
        cost_estimate=cost,
    )(x_flat, wslab, pack)

    return out_flat.reshape(B, S, D)


def reference_forward(x, params):
    (wq, wk, wv, wh, bh, w1, b1, w2, b2, g1, be1, g2, be2) = params
    hp = jax.lax.Precision.HIGHEST
    xf = x.astype(jnp.float32)

    def ln(y, g, b):
        mu = jnp.mean(y, axis=-1, keepdims=True)
        var = jnp.mean((y - mu) ** 2, axis=-1, keepdims=True)
        return (y - mu) * jax.lax.rsqrt(var + EPS) * g + b

    q = jnp.dot(xf, wq, precision=hp).reshape(B, S, H, DK).transpose(0, 2, 1, 3)
    k = jnp.dot(xf, wk, precision=hp).reshape(B, S, H, DK).transpose(0, 2, 1, 3)
    v = jnp.dot(xf, wv, precision=hp).reshape(B, S, H, DK).transpose(0, 2, 1, 3)
    scores = jnp.einsum("bhqd,bhkd->bhqk", q / np.sqrt(DK), k, precision=hp)
    a = jax.nn.softmax(scores, axis=-1)
    hh = jnp.einsum("bhqk,bhkd->bhqd", a, v,
                    precision=hp).transpose(0, 2, 1, 3).reshape(B, S, D)
    attn = jnp.dot(hh, wh, precision=hp) + bh[0]
    out1 = ln(xf + attn, g1[0], be1[0])
    hid = jnp.maximum(jnp.dot(out1, w1, precision=hp) + b1[0], 0.0)
    cnn = jnp.dot(hid, w2, precision=hp) + b2[0]
    return ln(out1 + cnn, g2[0], be2[0])


if __name__ == "__main__":
    key = jax.random.PRNGKey(0)
    keys = jax.random.split(key, 12)

    x = jax.random.normal(keys[0], (B, S, D), dtype=jnp.float32)

    # Deterministic parameter init (weights stored pre-transposed as (in, out)).
    wq = jax.random.normal(keys[1], (D, D), jnp.float32) * 0.1
    wk = jax.random.normal(keys[2], (D, D), jnp.float32) * 0.1
    wv = jax.random.normal(keys[3], (D, D), jnp.float32) * 0.1
    wh = jax.random.normal(keys[4], (D, D), jnp.float32) * 0.1
    bh = jax.random.normal(keys[5], (1, D), jnp.float32) * 0.1
    w1 = jax.random.normal(keys[6], (D, HID), jnp.float32) * 0.1
    b1 = jax.random.normal(keys[7], (1, HID), jnp.float32) * 0.1
    w2 = jax.random.normal(keys[8], (HID, D), jnp.float32) * 0.1
    b2 = jax.random.normal(keys[9], (1, D), jnp.float32) * 0.1
    g1 = jnp.ones((1, D), jnp.float32)
    be1 = jnp.zeros((1, D), jnp.float32)
    g2 = jnp.ones((1, D), jnp.float32)
    be2 = jnp.zeros((1, D), jnp.float32)

    params = (wq, wk, wv, wh, bh, w1, b1, w2, b2, g1, be1, g2, be2)

    # One-time packing (not on the per-call path), then the jitted forward.
    wslab, pack = prepare_params(params)
    wslab = jax.block_until_ready(wslab)
    pack = jax.block_until_ready(pack)

    out = jax.jit(encoder_layer)(x, wslab, pack)
    out = jax.block_until_ready(out)

    ref = reference_forward(x, params)
    # Tight f32 tolerance: exact softmax denominator, f32 MXU matmuls
    # (previous version needed 1e-2 because of the approx reciprocal).
    assert jnp.allclose(out, ref, atol=2e-4, rtol=2e-4), "mismatch vs reference"

    print("KERNEL_OK")
</pallas_src>

<mosaic_0001>
module attributes {stable_mosaic.version = 11 : i64} {
  func.func @encoder_layer_kernel(%arg0: i32, %arg1: memref<16x32xf32, #tpu.memory_space<vmem>>, %arg2: memref<32x256xf32, #tpu.memory_space<vmem>>, %arg3: memref<23x64xf32, #tpu.memory_space<vmem>>, %arg4: memref<16x32xf32, #tpu.memory_space<vmem>>) attributes {dimension_semantics = [#tpu.dimension_semantics<arbitrary>], iteration_bounds = array<i64: 1>, scalar_prefetch = 0 : i64, scratch_operands = 0 : i64, tpu.core_type = #tpu.core_type<tc>, window_params = [{pipeline_mode = #tpu.pipeline_mode<synchronous>, transform_indices = @transform_0, window_bounds = array<i64: 16, 32>}, {pipeline_mode = #tpu.pipeline_mode<synchronous>, transform_indices = @transform_1, window_bounds = array<i64: 32, 256>}, {pipeline_mode = #tpu.pipeline_mode<synchronous>, transform_indices = @transform_2, window_bounds = array<i64: 23, 64>}, {pipeline_mode = #tpu.pipeline_mode<synchronous>, transform_indices = @transform_3, window_bounds = array<i64: 16, 32>}]} {
    %c0 = arith.constant 0 : index
    %c0_0 = arith.constant 0 : index
    %0 = vector.load %arg1[%c0, %c0_0] : memref<16x32xf32, #tpu.memory_space<vmem>>, vector<16x32xf32>
    %c0_1 = arith.constant 0 : index
    %c0_2 = arith.constant 0 : index
    %1 = vector.load %arg2[%c0_1, %c0_2] : memref<32x256xf32, #tpu.memory_space<vmem>>, vector<32x256xf32>
    %c0_3 = arith.constant 0 : index
    %c0_4 = arith.constant 0 : index
    %2 = vector.load %arg3[%c0_3, %c0_4] : memref<23x64xf32, #tpu.memory_space<vmem>>, vector<23x64xf32>
    %3 = vector.extract_strided_slice %2 {offsets = [0, 0], sizes = [16, 16], strides = [1, 1]} : vector<23x64xf32> to vector<16x16xf32>
    %4 = vector.extract_strided_slice %2 {offsets = [16, 0], sizes = [1, 32], strides = [1, 1]} : vector<23x64xf32> to vector<1x32xf32>
    %5 = vector.extract_strided_slice %2 {offsets = [17, 0], sizes = [1, 32], strides = [1, 1]} : vector<23x64xf32> to vector<1x32xf32>
    %6 = vector.extract_strided_slice %2 {offsets = [18, 0], sizes = [1, 32], strides = [1, 1]} : vector<23x64xf32> to vector<1x32xf32>
    %7 = vector.extract_strided_slice %2 {offsets = [19, 0], sizes = [1, 32], strides = [1, 1]} : vector<23x64xf32> to vector<1x32xf32>
    %8 = vector.extract_strided_slice %2 {offsets = [20, 0], sizes = [1, 32], strides = [1, 1]} : vector<23x64xf32> to vector<1x32xf32>
    %9 = vector.extract_strided_slice %2 {offsets = [21, 0], sizes = [1, 32], strides = [1, 1]} : vector<23x64xf32> to vector<1x32xf32>
    %10 = vector.extract_strided_slice %2 {offsets = [22, 0], sizes = [1, 64], strides = [1, 1]} : vector<23x64xf32> to vector<1x64xf32>
    %11 = vector.extract_strided_slice %1 {offsets = [0, 0], sizes = [32, 128], strides = [1, 1]} : vector<32x256xf32> to vector<32x128xf32>
    %12 = vector.extract_strided_slice %1 {offsets = [0, 128], sizes = [32, 64], strides = [1, 1]} : vector<32x256xf32> to vector<32x64xf32>
    %13 = vector.extract_strided_slice %1 {offsets = [0, 192], sizes = [32, 64], strides = [1, 1]} : vector<32x256xf32> to vector<32x64xf32>
    %cst = arith.constant dense<0.000000e+00> : vector<16x128xf32>
    %14 = tpu.matmul %0, %11, %cst {dimension_numbers = #tpu.dot_dimension_numbers<[1], [0], [0], [1], [0, 0, 1, 1], [], []>} : vector<16x32xf32>, vector<32x128xf32>, vector<16x128xf32> -> vector<16x128xf32>
    %15 = vector.extract_strided_slice %14 {offsets = [0, 0], sizes = [16, 32], strides = [1, 1]} : vector<16x128xf32> to vector<16x32xf32>
    %16 = vector.extract_strided_slice %14 {offsets = [0, 32], sizes = [16, 32], strides = [1, 1]} : vector<16x128xf32> to vector<16x32xf32>
    %17 = vector.extract_strided_slice %15 {offsets = [0, 0], sizes = [16, 16], strides = [1, 1]} : vector<16x32xf32> to vector<16x16xf32>
    %18 = vector.extract_strided_slice %16 {offsets = [0, 0], sizes = [16, 16], strides = [1, 1]} : vector<16x32xf32> to vector<16x16xf32>
    %19 = vector.extract_strided_slice %14 {offsets = [0, 64], sizes = [16, 32], strides = [1, 1]} : vector<16x128xf32> to vector<16x32xf32>
    %cst_5 = arith.constant dense<0.000000e+00> : vector<16x16xf32>
    %20 = tpu.matmul %17, %18, %cst_5 {dimension_numbers = #tpu.dot_dimension_numbers<[1], [1], [0], [0], [0, 0, 1, 0], [], []>} : vector<16x16xf32>, vector<16x16xf32>, vector<16x16xf32> -> vector<16x16xf32>
    %cst_6 = arith.constant dense<0xFF800000> : vector<16xf32>
    %21 = vector.multi_reduction <maximumf>, %20, %cst_6 [1] : vector<16x16xf32> to vector<16xf32>
    %22 = vector.shape_cast %21 : vector<16xf32> to vector<16x1xf32>
    %23 = vector.broadcast %22 : vector<16x1xf32> to vector<16x16xf32>
    %24 = arith.subf %20, %23 : vector<16x16xf32>
    %25 = math.exp %24 : vector<16x16xf32>
    %26 = arith.mulf %25, %3 : vector<16x16xf32>
    %cst_7 = arith.constant dense<0.000000e+00> : vector<16xf32>
    %27 = vector.multi_reduction <add>, %26, %cst_7 [1] : vector<16x16xf32> to vector<16xf32>
    %28 = vector.shape_cast %27 : vector<16xf32> to vector<16x1xf32>
    %29 = vector.broadcast %28 : vector<16x1xf32> to vector<16x16xf32>
    %30 = arith.divf %26, %29 : vector<16x16xf32>
    %cst_8 = arith.constant dense<0.000000e+00> : vector<16x32xf32>
    %31 = tpu.matmul %30, %19, %cst_8 {dimension_numbers = #tpu.dot_dimension_numbers<[1], [0], [0], [1], [0, 0, 1, 1], [], []>} : vector<16x16xf32>, vector<16x32xf32>, vector<16x32xf32> -> vector<16x32xf32>
    %32 = vector.extract_strided_slice %15 {offsets = [0, 16], sizes = [16, 16], strides = [1, 1]} : vector<16x32xf32> to vector<16x16xf32>
    %33 = vector.extract_strided_slice %16 {offsets = [0, 16], sizes = [16, 16], strides = [1, 1]} : vector<16x32xf32> to vector<16x16xf32>
    %34 = vector.extract_strided_slice %14 {offsets = [0, 96], sizes = [16, 32], strides = [1, 1]} : vector<16x128xf32> to vector<16x32xf32>
    %cst_9 = arith.constant dense<0.000000e+00> : vector<16x16xf32>
    %35 = tpu.matmul %32, %33, %cst_9 {dimension_numbers = #tpu.dot_dimension_numbers<[1], [1], [0], [0], [0, 0, 1, 0], [], []>} : vector<16x16xf32>, vector<16x16xf32>, vector<16x16xf32> -> vector<16x16xf32>
    %cst_10 = arith.constant dense<0xFF800000> : vector<16xf32>
    %36 = vector.multi_reduction <maximumf>, %35, %cst_10 [1] : vector<16x16xf32> to vector<16xf32>
    %37 = vector.shape_cast %36 : vector<16xf32> to vector<16x1xf32>
    %38 = vector.broadcast %37 : vector<16x1xf32> to vector<16x16xf32>
    %39 = arith.subf %35, %38 : vector<16x16xf32>
    %40 = math.exp %39 : vector<16x16xf32>
    %41 = arith.mulf %40, %3 : vector<16x16xf32>
    %cst_11 = arith.constant dense<0.000000e+00> : vector<16xf32>
    %42 = vector.multi_reduction <add>, %41, %cst_11 [1] : vector<16x16xf32> to vector<16xf32>
    %43 = vector.shape_cast %42 : vector<16xf32> to vector<16x1xf32>
    %44 = vector.broadcast %43 : vector<16x1xf32> to vector<16x16xf32>
    %45 = arith.divf %41, %44 : vector<16x16xf32>
    %cst_12 = arith.constant dense<0.000000e+00> : vector<16x32xf32>
    %46 = tpu.matmul %45, %34, %cst_12 {dimension_numbers = #tpu.dot_dimension_numbers<[1], [0], [0], [1], [0, 0, 1, 1], [], []>} : vector<16x16xf32>, vector<16x32xf32>, vector<16x32xf32> -> vector<16x32xf32>
    %47 = arith.addf %31, %46 : vector<16x32xf32>
    %48 = vector.broadcast %4 : vector<1x32xf32> to vector<16x32xf32>
    %49 = arith.addf %47, %48 : vector<16x32xf32>
    %50 = arith.addf %0, %49 : vector<16x32xf32>
    %cst_13 = arith.constant dense<0.000000e+00> : vector<16xf32>
    %51 = vector.multi_reduction <add>, %50, %cst_13 [1] : vector<16x32xf32> to vector<16xf32>
    %52 = vector.shape_cast %51 : vector<16xf32> to vector<16x1xf32>
    %cst_14 = arith.constant 3.200000e+01 : f32
    %53 = vector.broadcast %cst_14 : f32 to vector<16x1xf32>
    %54 = arith.divf %52, %53 : vector<16x1xf32>
    %55 = vector.broadcast %54 : vector<16x1xf32> to vector<16x32xf32>
    %56 = arith.subf %50, %55 : vector<16x32xf32>
    %57 = arith.mulf %56, %56 : vector<16x32xf32>
    %cst_15 = arith.constant dense<0.000000e+00> : vector<16xf32>
    %58 = vector.multi_reduction <add>, %57, %cst_15 [1] : vector<16x32xf32> to vector<16xf32>
    %59 = vector.shape_cast %58 : vector<16xf32> to vector<16x1xf32>
    %cst_16 = arith.constant 3.200000e+01 : f32
    %60 = vector.broadcast %cst_16 : f32 to vector<16x1xf32>
    %61 = arith.divf %59, %60 : vector<16x1xf32>
    %62 = vector.broadcast %54 : vector<16x1xf32> to vector<16x32xf32>
    %63 = arith.subf %50, %62 : vector<16x32xf32>
    %cst_17 = arith.constant 9.99999997E-7 : f32
    %64 = vector.broadcast %cst_17 : f32 to vector<16x1xf32>
    %65 = arith.addf %61, %64 : vector<16x1xf32>
    %66 = math.rsqrt %65 : vector<16x1xf32>
    %67 = vector.broadcast %66 : vector<16x1xf32> to vector<16x32xf32>
    %68 = arith.mulf %63, %67 : vector<16x32xf32>
    %69 = vector.broadcast %5 : vector<1x32xf32> to vector<16x32xf32>
    %70 = arith.mulf %68, %69 : vector<16x32xf32>
    %71 = vector.broadcast %6 : vector<1x32xf32> to vector<16x32xf32>
    %72 = arith.addf %70, %71 : vector<16x32xf32>
    %cst_18 = arith.constant dense<0.000000e+00> : vector<16x64xf32>
    %73 = tpu.matmul %72, %12, %cst_18 {dimension_numbers = #tpu.dot_dimension_numbers<[1], [0], [0], [1], [0, 0, 1, 1], [], []>} : vector<16x32xf32>, vector<32x64xf32>, vector<16x64xf32> -> vector<16x64xf32>
    %74 = vector.broadcast %10 : vector<1x64xf32> to vector<16x64xf32>
    %75 = arith.addf %73, %74 : vector<16x64xf32>
    %cst_19 = arith.constant 0.000000e+00 : f32
    %76 = vector.broadcast %cst_19 : f32 to vector<16x64xf32>
    %77 = arith.maximumf %75, %76 : vector<16x64xf32>
    %cst_20 = arith.constant dense<0.000000e+00> : vector<16x32xf32>
    %78 = tpu.matmul %77, %13, %cst_20 {dimension_numbers = #tpu.dot_dimension_numbers<[1], [1], [0], [0], [0, 0, 1, 0], [], []>} : vector<16x64xf32>, vector<32x64xf32>, vector<16x32xf32> -> vector<16x32xf32>
    %79 = vector.broadcast %7 : vector<1x32xf32> to vector<16x32xf32>
    %80 = arith.addf %78, %79 : vector<16x32xf32>
    %81 = arith.addf %72, %80 : vector<16x32xf32>
    %cst_21 = arith.constant dense<0.000000e+00> : vector<16xf32>
    %82 = vector.multi_reduction <add>, %81, %cst_21 [1] : vector<16x32xf32> to vector<16xf32>
    %83 = vector.shape_cast %82 : vector<16xf32> to vector<16x1xf32>
    %cst_22 = arith.constant 3.200000e+01 : f32
    %84 = vector.broadcast %cst_22 : f32 to vector<16x1xf32>
    %85 = arith.divf %83, %84 : vector<16x1xf32>
    %86 = vector.broadcast %85 : vector<16x1xf32> to vector<16x32xf32>
    %87 = arith.subf %81, %86 : vector<16x32xf32>
    %88 = arith.mulf %87, %87 : vector<16x32xf32>
    %cst_23 = arith.constant dense<0.000000e+00> : vector<16xf32>
    %89 = vector.multi_reduction <add>, %88, %cst_23 [1] : vector<16x32xf32> to vector<16xf32>
    %90 = vector.shape_cast %89 : vector<16xf32> to vector<16x1xf32>
    %cst_24 = arith.constant 3.200000e+01 : f32
    %91 = vector.broadcast %cst_24 : f32 to vector<16x1xf32>
    %92 = arith.divf %90, %91 : vector<16x1xf32>
    %93 = vector.broadcast %85 : vector<16x1xf32> to vector<16x32xf32>
    %94 = arith.subf %81, %93 : vector<16x32xf32>
    %cst_25 = arith.constant 9.99999997E-7 : f32
    %95 = vector.broadcast %cst_25 : f32 to vector<16x1xf32>
    %96 = arith.addf %92, %95 : vector<16x1xf32>
    %97 = math.rsqrt %96 : vector<16x1xf32>
    %98 = vector.broadcast %97 : vector<16x1xf32> to vector<16x32xf32>
    %99 = arith.mulf %94, %98 : vector<16x32xf32>
    %100 = vector.broadcast %8 : vector<1x32xf32> to vector<16x32xf32>
    %101 = arith.mulf %99, %100 : vector<16x32xf32>
    %102 = vector.broadcast %9 : vector<1x32xf32> to vector<16x32xf32>
    %103 = arith.addf %101, %102 : vector<16x32xf32>
    %c0_26 = arith.constant 0 : index
    %c0_27 = arith.constant 0 : index
    %104 = vector.load %arg4[%c0_26, %c0_27] : memref<16x32xf32, #tpu.memory_space<vmem>>, vector<16x32xf32>
    tpu.vector_store %arg4[%c0_26, %c0_27], %103 {strides = array<i32>} : memref<16x32xf32, #tpu.memory_space<vmem>>, vector<16x32xf32>,
    return
  }
  func.func @transform_0(%arg0: i32) -> (i32, i32) {
    %c0_i32 = arith.constant 0 : i32
    %c0_i32_0 = arith.constant 0 : i32
    %c0_i32_1 = arith.constant 0 : i32
    return %c0_i32, %c0_i32_0 : i32, i32
  }
  func.func @transform_1(%arg0: i32) -> (i32, i32) {
    %c0_i32 = arith.constant 0 : i32
    %c0_i32_0 = arith.constant 0 : i32
    %c0_i32_1 = arith.constant 0 : i32
    return %c0_i32, %c0_i32_0 : i32, i32
  }
  func.func @transform_2(%arg0: i32) -> (i32, i32) {
    %c0_i32 = arith.constant 0 : i32
    %c0_i32_0 = arith.constant 0 : i32
    %c0_i32_1 = arith.constant 0 : i32
    return %c0_i32, %c0_i32_0 : i32, i32
  }
  func.func @transform_3(%arg0: i32) -> (i32, i32) {
    %c0_i32 = arith.constant 0 : i32
    %c0_i32_0 = arith.constant 0 : i32
    %c0_i32_1 = arith.constant 0 : i32
    return %c0_i32, %c0_i32_0 : i32, i32
  }
}

</mosaic_0001>

<llo_original>
// kernel: encoder_layer.1
$region0: #{encoder_layer.1}
  #allocation0 [shape = 'u32[]', space=smem, size = 0x4, offset = 0x4, fixed_abs, tag = 'smem constant byte address 0x4 - core index']
  #allocation1 [shape = 'u32[144,128]{1,0:T(1,128)}', space=vmem, size = 0x12000, scoped, tag = 'internal scratch']
  %s0 = inlined_call_operand.hbm [shape: f32[16,32], index: 0, kind: input, shape index: {}]
  %s1 = inlined_call_operand.hbm [shape: f32[32,256], index: 1, kind: input, shape index: {}]
  %s2 = inlined_call_operand.hbm [shape: f32[23,64], index: 2, kind: input, shape index: {}]
  %s3 = inlined_call_operand.hbm [shape: f32[16,32], index: 3, kind: output, shape index: {}]
  %s4 = sld [smem:[#allocation0]]
  $region34: #{encoder_layer.1} parent=0
    _
  %s6 = ssub.s32 1, %s4
  %s7 = scalar_select 0, %s6, %s4
  $region1: #{encoder_layer.1} parent=0
    #allocation2 [shape = 'u8[8192]{0}', space=vmem, size = 0x2000, scoped, tag = 'input window, operand 0, single buffered']
    #allocation3 [shape = 's32[1]{0}', space=sflag, size = 0x4, scoped, tag = 'scoped memory for encoder_layer.1']
    #allocation4 [shape = 's32[1]{0}', space=sflag, size = 0x4, scoped, tag = 'scoped memory for encoder_layer.1']
    #allocation5 [shape = 'u8[32768]{0}', space=vmem, size = 0x8000, scoped, tag = 'input window, operand 1, single buffered']
    #allocation6 [shape = 's32[1]{0}', space=sflag, size = 0x4, scoped, tag = 'scoped memory for encoder_layer.1']
    #allocation7 [shape = 'u8[12288]{0}', space=vmem, size = 0x3000, scoped, tag = 'input window, operand 2, single buffered']
    #allocation8 [shape = 'u8[8192]{0}', space=vmem, size = 0x2000, scoped, tag = 'output window, operand 0, single buffered']
    %8 = vsyncpa [#allocation3], 0
    %9 = vsyncpa [#allocation6], 0
    %10 = vsyncpa [#allocation4], 0
    // Predicated region
    $region2: #{encoder_layer.1} parent=1 // pred_check
      _
    $region3: #{encoder_layer.1} parent=1 // pred_check_branch
      %12 = sbr.rel (0) target = $region5
    $region4: #{encoder_layer.1} parent=1 // pred_region
      %s14 = ssub.s32 256, 256
      %15 = vsyncadd [#allocation3], %s14
      %s16 = sshll.u32 [#allocation2], 4
      %s17 = int_to_ptr.vmem [resolvable:$true] %s16
      %22 = dma.hbm_to_vmem [thread:$0]  %s0, 256, %s17, [#allocation3], 128, 128, 8
    $region5: #{encoder_layer.1} parent=1 // pred_fallthru
      _
    // Predicated region
    $region6: #{encoder_layer.1} parent=1 // pred_check
      _
    $region7: #{encoder_layer.1} parent=1 // pred_check_branch
      %24 = sbr.rel (0) target = $region9
    $region8: #{encoder_layer.1} parent=1 // pred_region
      %s26 = ssub.s32 1024, 1024
      %27 = vsyncadd [#allocation6], %s26
      %s28 = sshll.u32 [#allocation5], 4
      %s29 = int_to_ptr.vmem [resolvable:$true] %s28
      %34 = dma.hbm_to_vmem [thread:$0]  %s1, 1024, %s29, [#allocation6], 256, 256, 16
    $region9: #{encoder_layer.1} parent=1 // pred_fallthru
      _
    // Predicated region
    $region10: #{encoder_layer.1} parent=1 // pred_check
      _
    $region11: #{encoder_layer.1} parent=1 // pred_check_branch
      %36 = sbr.rel (0) target = $region13
    $region12: #{encoder_layer.1} parent=1 // pred_region
      %s38 = ssub.s32 384, 384
      %39 = vsyncadd [#allocation6], %s38
      %s40 = sshll.u32 [#allocation7], 4
      %s41 = int_to_ptr.vmem [resolvable:$true] %s40
      %46 = dma.hbm_to_vmem [thread:$0]  %s2, 384, %s41, [#allocation6], 128, 128, 8
    $region13: #{encoder_layer.1} parent=1 // pred_fallthru
      _
    // Predicated region
    $region14: #{encoder_layer.1} parent=1 // pred_check
      _
    $region15: #{encoder_layer.1} parent=1 // pred_check_branch
      %48 = sbr.rel (0) target = $region17
    $region16: #{encoder_layer.1} parent=1 // pred_region
      %49 = dma.done [#allocation3], 256
    $region17: #{encoder_layer.1} parent=1 // pred_fallthru
      _
    // Predicated region
    $region18: #{encoder_layer.1} parent=1 // pred_check
      _
    $region19: #{encoder_layer.1} parent=1 // pred_check_branch
      %51 = sbr.rel (0) target = $region21
    $region20: #{encoder_layer.1} parent=1 // pred_region
      %52 = dma.done [#allocation6], 1024
    $region21: #{encoder_layer.1} parent=1 // pred_fallthru
      _
    // Predicated region
    $region22: #{encoder_layer.1} parent=1 // pred_check
      _
    $region23: #{encoder_layer.1} parent=1 // pred_check_branch
      %54 = sbr.rel (0) target = $region25
    $region24: #{encoder_layer.1} parent=1 // pred_region
      %55 = dma.done [#allocation6], 384
    $region25: #{encoder_layer.1} parent=1 // pred_fallthru
      _
    %v56 = vld [vmem:[#allocation2] sm:$0xff]
    %v57 = vld [vmem:[#allocation2 + $0x8] sm:$0xff]
    %v58 = vld [vmem:[#allocation5] sm:$0xff]
    %v59 = vld [vmem:[#allocation5 + $0x8] sm:$0xff]
    %v60 = vld [vmem:[#allocation5 + $0x10] sm:$0xff]
    %v61 = vld [vmem:[#allocation5 + $0x18] sm:$0xff]
    %v62 = vld [vmem:[#allocation5 + $0x20] sm:$0xff]
    %v63 = vld [vmem:[#allocation5 + $0x28] sm:$0xff]
    %v64 = vld [vmem:[#allocation5 + $0x30] sm:$0xff]
    %v65 = vld [vmem:[#allocation5 + $0x38] sm:$0xff]
    %v66 = vld [vmem:[#allocation7] sm:$0xff]
    %v67 = vld [vmem:[#allocation7 + $0x8] sm:$0xff]
    %v68 = vld [vmem:[#allocation7 + $0x10] sm:$0x7f]
    %vm69 = vcmask 261120
    %v71 = vsel %vm69, %v56, 0
    %v74 = vsel %vm69, %v57, 0
    %76 = vmatprep.subr.mxu0 0.0
    %77 = vmatpush1.msra.mxu0 %v58
    %78 = vmatprep.subr.mxu0 0.0
    %79 = vmatpush1.msra.mxu0 %v60
    %80 = vmatprep.subr.mxu0 0.0
    %81 = vmatpush1.msra.mxu0 %v62
    %82 = vmatprep.subr.mxu0 0.0
    %83 = vmatpush1.msra.mxu0 %v64
    %84 = vmatprep.subr.mxu0 0.0
    %85 = vmatpush1.msra.mxu0 0.0
    %86 = vmatprep.subr.mxu0 0.0
    %87 = vmatpush1.msra.mxu0 0.0
    %88 = vmatprep.subr.mxu0 0.0
    %89 = vmatpush1.msra.mxu0 0.0
    %90 = vmatprep.subr.mxu0 0.0
    %91 = vmatpush1.msra.mxu0 0.0
    %92 = vmatprep.subr.mxu0 0.0
    %93 = vmatpush1.msra.mxu0 0.0
    %94 = vmatprep.subr.mxu0 0.0
    %95 = vmatpush1.msra.mxu0 0.0
    %96 = vmatprep.subr.mxu0 0.0
    %97 = vmatpush1.msra.mxu0 0.0
    %98 = vmatprep.subr.mxu0 0.0
    %99 = vmatpush1.msra.mxu0 0.0
    %100 = vmatprep.subr.mxu0 0.0
    %101 = vmatpush1.msra.mxu0 0.0
    %102 = vmatprep.subr.mxu0 0.0
    %103 = vmatpush1.msra.mxu0 0.0
    %104 = vmatprep.subr.mxu0 0.0
    %105 = vmatpush1.msra.mxu0 0.0
    %106 = vmatprep.subr.mxu0 0.0
    %107 = vmatpush1.msra.mxu0 0.0
    %108 = vmatprep.subr.mxu0 0.0
    %109 = vmatpush1.msra.mxu0 0.0
    %110 = vmatprep.subr.mxu0 0.0
    %111 = vmatpush1.msra.mxu0 0.0
    %112 = vmatprep.subr.mxu0 0.0
    %113 = vmatpush1.msra.mxu0 0.0
    %114 = vmatprep.subr.mxu0 0.0
    %115 = vmatpush1.msra.mxu0 0.0
    %116 = vmatprep.subr.mxu0 0.0
    %117 = vmatpush1.msra.mxu0 0.0
    %118 = vmatprep.subr.mxu0 0.0
    %119 = vmatpush1.msra.mxu0 0.0
    %120 = vmatprep.subr.mxu0 0.0
    %121 = vmatpush1.msra.mxu0 0.0
    %122 = vmatprep.subr.mxu0 0.0
    %123 = vmatpush1.msra.mxu0 0.0
    %124 = vmatprep.subr.mxu0 0.0
    %125 = vmatpush1.msra.mxu0 0.0
    %126 = vmatprep.subr.mxu0 0.0
    %127 = vmatpush1.msra.mxu0 0.0
    %128 = vmatprep.subr.mxu0 0.0
    %129 = vmatpush1.msra.mxu0 0.0
    %130 = vmatprep.subr.mxu0 0.0
    %131 = vmatpush1.msra.mxu0 0.0
    %132 = vmatprep.subr.mxu0 0.0
    %133 = vmatpush1.msra.mxu0 0.0
    %134 = vmatprep.subr.mxu0 0.0
    %135 = vmatpush1.msra.mxu0 0.0
    %136 = vmatprep.subr.mxu0 0.0
    %137 = vmatpush1.msra.mxu0 0.0
    %138 = vmatprep.subr.mxu0 0.0
    %139 = vmatpush1.msra.mxu0 0.0
    %140 = vmatprep.mubr.f32.mxu0 0.0
    %141 = vmatmul.mubr.f32.gmra.mrb[0].mxu0 %v71
    %v142 = vpop.f32.mrb[0].mxu0
    %v143 = vadd.f32 0.0, %v142
    %v144 = vpop.f32.mrb[0].mxu0
    %145 = vmatprep.mubr.f32.mxu0 0.0
    %146 = vmatmul.mubr.f32.gmra.mrb[0].mxu0 %v74
    %v147 = vpop.f32.mrb[0].mxu0
    %v148 = vadd.f32 0.0, %v147
    %v149 = vpop.f32.mrb[0].mxu0
    %150 = vdwg.mxu0
    %153 = vrot.lane.b32.xlu0 %v143, 96
    %v154 = vpop.permute.xlu0 %153
    %155 = vrot.lane.b32.xlu0 %v148, 96
    %v156 = vpop.permute.xlu0 %155
    %vm157 = vcmask 130048
    %v158 = vsel %vm157, %v143, 0
    %v160 = vsel %vm157, %v148, 0
    %v162 = vsel %vm157, %v154, 0
    %v164 = vsel %vm157, %v156, 0
    %166 = vmatprep.subr.mxu0 0.0
    %167 = vmatpush1.xpose.msra.mxu0 %v162
    %168 = vmatprep.subr.mxu0 0.0
    %169 = vmatpush1.xpose.msra.mxu0 %v164
    %170 = vmatprep.subr.mxu0 0.0
    %171 = vmatpush1.xpose.msra.mxu0 0.0
    %172 = vmatprep.subr.mxu0 0.0
    %173 = vmatpush1.xpose.msra.mxu0 0.0
    %174 = vmatprep.subr.mxu0 0.0
    %175 = vmatpush1.xpose.msra.mxu0 0.0
    %176 = vmatprep.subr.mxu0 0.0
    %177 = vmatpush1.xpose.msra.mxu0 0.0
    %178 = vmatprep.subr.mxu0 0.0
    %179 = vmatpush1.xpose.msra.mxu0 0.0
    %180 = vmatprep.subr.mxu0 0.0
    %181 = vmatpush1.xpose.msra.mxu0 0.0
    %182 = vmatprep.subr.mxu0 0.0
    %183 = vmatpush1.xpose.msra.mxu0 0.0
    %184 = vmatprep.subr.mxu0 0.0
    %185 = vmatpush1.xpose.msra.mxu0 0.0
    %186 = vmatprep.subr.mxu0 0.0
    %187 = vmatpush1.xpose.msra.mxu0 0.0
    %188 = vmatprep.subr.mxu0 0.0
    %189 = vmatpush1.xpose.msra.mxu0 0.0
    %190 = vmatprep.subr.mxu0 0.0
    %191 = vmatpush1.xpose.msra.mxu0 0.0
    %192 = vmatprep.subr.mxu0 0.0
    %193 = vmatpush1.xpose.msra.mxu0 0.0
    %194 = vmatprep.subr.mxu0 0.0
    %195 = vmatpush1.xpose.msra.mxu0 0.0
    %196 = vmatprep.subr.mxu0 0.0
    %197 = vmatpush1.xpose.msra.mxu0 0.0
    %198 = vmatprep.subr.mxu0 0.0
    %199 = vmatpush1.xpose.msra.mxu0 0.0
    %200 = vmatprep.subr.mxu0 0.0
    %201 = vmatpush1.xpose.msra.mxu0 0.0
    %202 = vmatprep.subr.mxu0 0.0
    %203 = vmatpush1.xpose.msra.mxu0 0.0
    %204 = vmatprep.subr.mxu0 0.0
    %205 = vmatpush1.xpose.msra.mxu0 0.0
    %206 = vmatprep.subr.mxu0 0.0
    %207 = vmatpush1.xpose.msra.mxu0 0.0
    %208 = vmatprep.subr.mxu0 0.0
    %209 = vmatpush1.xpose.msra.mxu0 0.0
    %210 = vmatprep.subr.mxu0 0.0
    %211 = vmatpush1.xpose.msra.mxu0 0.0
    %212 = vmatprep.subr.mxu0 0.0
    %213 = vmatpush1.xpose.msra.mxu0 0.0
    %214 = vmatprep.subr.mxu0 0.0
    %215 = vmatpush1.xpose.msra.mxu0 0.0
    %216 = vmatprep.subr.mxu0 0.0
    %217 = vmatpush1.xpose.msra.mxu0 0.0
    %218 = vmatprep.subr.mxu0 0.0
    %219 = vmatpush1.xpose.msra.mxu0 0.0
    %220 = vmatprep.subr.mxu0 0.0
    %221 = vmatpush1.xpose.msra.mxu0 0.0
    %222 = vmatprep.subr.mxu0 0.0
    %223 = vmatpush1.xpose.msra.mxu0 0.0
    %224 = vmatprep.subr.mxu0 0.0
    %225 = vmatpush1.xpose.msra.mxu0 0.0
    %226 = vmatprep.subr.mxu0 0.0
    %227 = vmatpush1.xpose.msra.mxu0 0.0
    %228 = vmatprep.subr.mxu0 0.0
    %229 = vmatpush1.xpose.msra.mxu0 0.0
    %230 = vmatprep.mubr.f32.mxu0 0.0
    %231 = vmatmul.mubr.f32.gmra.mrb[0].mxu0 %v158
    %v232 = vpop.f32.mrb[0].mxu0
    %v233 = vadd.f32 0.0, %v232
    %v234 = vpop.f32.mrb[0].mxu0
    %235 = vmatprep.mubr.f32.mxu0 0.0
    %236 = vmatmul.mubr.f32.gmra.mrb[0].mxu0 %v160
    %v237 = vpop.f32.mrb[0].mxu0
    %v238 = vadd.f32 0.0, %v237
    %v239 = vpop.f32.mrb[0].mxu0
    %240 = vdwg.mxu0
    %v241 = vsel %vm157, %v233, -inf
    %242 = vmax.xlane.f32.xlu0 %v241
    %v243 = vpop.xlane.xlu0 %242
    %v244 = vsel %vm157, %v238, -inf
    %245 = vmax.xlane.f32.xlu0 %v244
    %v246 = vpop.xlane.xlu0 %245
    %v247 = vsub.f32 %v233, %v243
    %v248 = vsub.f32 %v238, %v246
    %v249 = vmul.f32 %v247, 1.442695
    %v250 = vpow.pop %v249
    %v251 = vmul.f32 %v248, 1.442695
    %v252 = vpow.pop %v251
    %v253 = vmul.f32 %v250, %v66
    %v254 = vmul.f32 %v252, %v67
    %v255 = vsel %vm157, %v253, 0.0
    %256 = vadd.xlane.f32.xlu0 %v255
    %v257 = vpop.xlane.xlu0 %256
    %v258 = vsel %vm157, %v254, 0.0
    %259 = vadd.xlane.f32.xlu0 %v258
    %v260 = vpop.xlane.xlu0 %259
    %v261 = vrcp.pop %v257
    %v262 = vmul.f32 %v253, %v261
    %v263 = vrcp.pop %v260
    %v264 = vmul.f32 %v254, %v263
    %265 = vrot.lane.b32.xlu0 %v143, 112
    %v266 = vpop.permute.xlu0 %265
    %267 = vrot.lane.b32.xlu0 %v148, 112
    %v268 = vpop.permute.xlu0 %267
    %269 = vrot.lane.b32.xlu0 %v143, 80
    %v270 = vpop.permute.xlu0 %269
    %271 = vrot.lane.b32.xlu0 %v148, 80
    %v272 = vpop.permute.xlu0 %271
    %v273 = vsel %vm157, %v266, 0
    %v275 = vsel %vm157, %v268, 0
    %v277 = vsel %vm157, %v270, 0
    %v279 = vsel %vm157, %v272, 0
    %281 = vmatprep.subr.mxu0 0.0
    %282 = vmatpush1.xpose.msra.mxu0 %v277
    %283 = vmatprep.subr.mxu0 0.0
    %284 = vmatpush1.xpose.msra.mxu0 %v279
    %285 = vmatprep.subr.mxu0 0.0
    %286 = vmatpush1.xpose.msra.mxu0 0.0
    %287 = vmatprep.subr.mxu0 0.0
    %288 = vmatpush1.xpose.msra.mxu0 0.0
    %289 = vmatprep.subr.mxu0 0.0
    %290 = vmatpush1.xpose.msra.mxu0 0.0
    %291 = vmatprep.subr.mxu0 0.0
    %292 = vmatpush1.xpose.msra.mxu0 0.0
    %293 = vmatprep.subr.mxu0 0.0
    %294 = vmatpush1.xpose.msra.mxu0 0.0
    %295 = vmatprep.subr.mxu0 0.0
    %296 = vmatpush1.xpose.msra.mxu0 0.0
    %297 = vmatprep.subr.mxu0 0.0
    %298 = vmatpush1.xpose.msra.mxu0 0.0
    %299 = vmatprep.subr.mxu0 0.0
    %300 = vmatpush1.xpose.msra.mxu0 0.0
    %301 = vmatprep.subr.mxu0 0.0
    %302 = vmatpush1.xpose.msra.mxu0 0.0
    %303 = vmatprep.subr.mxu0 0.0
    %304 = vmatpush1.xpose.msra.mxu0 0.0
    %305 = vmatprep.subr.mxu0 0.0
    %306 = vmatpush1.xpose.msra.mxu0 0.0
    %307 = vmatprep.subr.mxu0 0.0
    %308 = vmatpush1.xpose.msra.mxu0 0.0
    %309 = vmatprep.subr.mxu0 0.0
    %310 = vmatpush1.xpose.msra.mxu0 0.0
    %311 = vmatprep.subr.mxu0 0.0
    %312 = vmatpush1.xpose.msra.mxu0 0.0
    %313 = vmatprep.subr.mxu0 0.0
    %314 = vmatpush1.xpose.msra.mxu0 0.0
    %315 = vmatprep.subr.mxu0 0.0
    %316 = vmatpush1.xpose.msra.mxu0 0.0
    %317 = vmatprep.subr.mxu0 0.0
    %318 = vmatpush1.xpose.msra.mxu0 0.0
    %319 = vmatprep.subr.mxu0 0.0
    %320 = vmatpush1.xpose.msra.mxu0 0.0
    %321 = vmatprep.subr.mxu0 0.0
    %322 = vmatpush1.xpose.msra.mxu0 0.0
    %323 = vmatprep.subr.mxu0 0.0
    %324 = vmatpush1.xpose.msra.mxu0 0.0
    %325 = vmatprep.subr.mxu0 0.0
    %326 = vmatpush1.xpose.msra.mxu0 0.0
    %327 = vmatprep.subr.mxu0 0.0
    %328 = vmatpush1.xpose.msra.mxu0 0.0
    %329 = vmatprep.subr.mxu0 0.0
    %330 = vmatpush1.xpose.msra.mxu0 0.0
    %331 = vmatprep.subr.mxu0 0.0
    %332 = vmatpush1.xpose.msra.mxu0 0.0
    %333 = vmatprep.subr.mxu0 0.0
    %334 = vmatpush1.xpose.msra.mxu0 0.0
    %335 = vmatprep.subr.mxu0 0.0
    %336 = vmatpush1.xpose.msra.mxu0 0.0
    %337 = vmatprep.subr.mxu0 0.0
    %338 = vmatpush1.xpose.msra.mxu0 0.0
    %339 = vmatprep.subr.mxu0 0.0
    %340 = vmatpush1.xpose.msra.mxu0 0.0
    %341 = vmatprep.subr.mxu0 0.0
    %342 = vmatpush1.xpose.msra.mxu0 0.0
    %343 = vmatprep.subr.mxu0 0.0
    %344 = vmatpush1.xpose.msra.mxu0 0.0
    %345 = vmatprep.mubr.f32.mxu0 0.0
    %346 = vmatmul.mubr.f32.gmra.mrb[0].mxu0 %v273
    %v347 = vpop.f32.mrb[0].mxu0
    %v348 = vadd.f32 0.0, %v347
    %v349 = vpop.f32.mrb[0].mxu0
    %350 = vmatprep.mubr.f32.mxu0 0.0
    %351 = vmatmul.mubr.f32.gmra.mrb[0].mxu0 %v275
    %v352 = vpop.f32.mrb[0].mxu0
    %v353 = vadd.f32 0.0, %v352
    %v354 = vpop.f32.mrb[0].mxu0
    %355 = vdwg.mxu0
    %v356 = vsel %vm157, %v348, -inf
    %357 = vmax.xlane.f32.xlu0 %v356
    %v358 = vpop.xlane.xlu0 %357
    %v359 = vsel %vm157, %v353, -inf
    %360 = vmax.xlane.f32.xlu0 %v359
    %v361 = vpop.xlane.xlu0 %360
    %v362 = vsub.f32 %v348, %v358
    %v363 = vsub.f32 %v353, %v361
    %v364 = vmul.f32 %v362, 1.442695
    %v365 = vpow.pop %v364
    %v366 = vmul.f32 %v363, 1.442695
    %v367 = vpow.pop %v366
    %v368 = vmul.f32 %v365, %v66
    %v369 = vmul.f32 %v367, %v67
    %v370 = vsel %vm157, %v368, 0.0
    %371 = vadd.xlane.f32.xlu0 %v370
    %v372 = vpop.xlane.xlu0 %371
    %v373 = vsel %vm157, %v369, 0.0
    %374 = vadd.xlane.f32.xlu0 %v373
    %v375 = vpop.xlane.xlu0 %374
    %v376 = vrcp.pop %v372
    %v377 = vmul.f32 %v368, %v376
    %v378 = vrcp.pop %v375
    %v379 = vmul.f32 %v369, %v378
    %380 = vrot.lane.b32.xlu0 %v143, 32
    %v381 = vpop.permute.xlu0 %380
    %382 = vrot.lane.b32.xlu0 %v148, 32
    %v383 = vpop.permute.xlu0 %382
    %v387 = vsel %vm157, %v377, 0
    %v390 = vsel %vm157, %v379, 0
    %392 = vmatprep.subr.mxu0 0.0
    %393 = vmatpush1.msra.mxu0 %v381
    %394 = vmatprep.subr.mxu0 0.0
    %395 = vmatpush1.msra.mxu0 %v383
    %396 = vmatprep.subr.mxu0 0.0
    %397 = vmatpush1.msra.mxu0 0.0
    %398 = vmatprep.subr.mxu0 0.0
    %399 = vmatpush1.msra.mxu0 0.0
    %400 = vmatprep.subr.mxu0 0.0
    %401 = vmatpush1.msra.mxu0 0.0
    %402 = vmatprep.subr.mxu0 0.0
    %403 = vmatpush1.msra.mxu0 0.0
    %404 = vmatprep.subr.mxu0 0.0
    %405 = vmatpush1.msra.mxu0 0.0
    %406 = vmatprep.subr.mxu0 0.0
    %407 = vmatpush1.msra.mxu0 0.0
    %408 = vmatprep.subr.mxu0 0.0
    %409 = vmatpush1.msra.mxu0 0.0
    %410 = vmatprep.subr.mxu0 0.0
    %411 = vmatpush1.msra.mxu0 0.0
    %412 = vmatprep.subr.mxu0 0.0
    %413 = vmatpush1.msra.mxu0 0.0
    %414 = vmatprep.subr.mxu0 0.0
    %415 = vmatpush1.msra.mxu0 0.0
    %416 = vmatprep.subr.mxu0 0.0
    %417 = vmatpush1.msra.mxu0 0.0
    %418 = vmatprep.subr.mxu0 0.0
    %419 = vmatpush1.msra.mxu0 0.0
    %420 = vmatprep.subr.mxu0 0.0
    %421 = vmatpush1.msra.mxu0 0.0
    %422 = vmatprep.subr.mxu0 0.0
    %423 = vmatpush1.msra.mxu0 0.0
    %424 = vmatprep.subr.mxu0 0.0
    %425 = vmatpush1.msra.mxu0 0.0
    %426 = vmatprep.subr.mxu0 0.0
    %427 = vmatpush1.msra.mxu0 0.0
    %428 = vmatprep.subr.mxu0 0.0
    %429 = vmatpush1.msra.mxu0 0.0
    %430 = vmatprep.subr.mxu0 0.0
    %431 = vmatpush1.msra.mxu0 0.0
    %432 = vmatprep.subr.mxu0 0.0
    %433 = vmatpush1.msra.mxu0 0.0
    %434 = vmatprep.subr.mxu0 0.0
    %435 = vmatpush1.msra.mxu0 0.0
    %436 = vmatprep.subr.mxu0 0.0
    %437 = vmatpush1.msra.mxu0 0.0
    %438 = vmatprep.subr.mxu0 0.0
    %439 = vmatpush1.msra.mxu0 0.0
    %440 = vmatprep.subr.mxu0 0.0
    %441 = vmatpush1.msra.mxu0 0.0
    %442 = vmatprep.subr.mxu0 0.0
    %443 = vmatpush1.msra.mxu0 0.0
    %444 = vmatprep.subr.mxu0 0.0
    %445 = vmatpush1.msra.mxu0 0.0
    %446 = vmatprep.subr.mxu0 0.0
    %447 = vmatpush1.msra.mxu0 0.0
    %448 = vmatprep.subr.mxu0 0.0
    %449 = vmatpush1.msra.mxu0 0.0
    %450 = vmatprep.subr.mxu0 0.0
    %451 = vmatpush1.msra.mxu0 0.0
    %452 = vmatprep.subr.mxu0 0.0
    %453 = vmatpush1.msra.mxu0 0.0
    %454 = vmatprep.subr.mxu0 0.0
    %455 = vmatpush1.msra.mxu0 0.0
    %456 = vmatprep.mubr.f32.mxu0 0.0
    %457 = vmatmul.mubr.f32.gmra.mrb[0].mxu0 %v387
    %v458 = vpop.f32.mrb[0].mxu0
    %v459 = vadd.f32 0.0, %v458
    %v460 = vpop.f32.mrb[0].mxu0
    %461 = vmatprep.mubr.f32.mxu0 0.0
    %462 = vmatmul.mubr.f32.gmra.mrb[0].mxu0 %v390
    %v463 = vpop.f32.mrb[0].mxu0
    %v464 = vadd.f32 0.0, %v463
    %v465 = vpop.f32.mrb[0].mxu0
    %466 = vdwg.mxu0
    %467 = vrot.lane.b32.xlu0 %v143, 64
    %v468 = vpop.permute.xlu0 %467
    %469 = vrot.lane.b32.xlu0 %v148, 64
    %v470 = vpop.permute.xlu0 %469
    %v474 = vsel %vm157, %v262, 0
    %v477 = vsel %vm157, %v264, 0
    %479 = vmatprep.subr.mxu0 0.0
    %480 = vmatpush1.msra.mxu0 %v468
    %481 = vmatprep.subr.mxu0 0.0
    %482 = vmatpush1.msra.mxu0 %v470
    %483 = vmatprep.subr.mxu0 0.0
    %484 = vmatpush1.msra.mxu0 0.0
    %485 = vmatprep.subr.mxu0 0.0
    %486 = vmatpush1.msra.mxu0 0.0
    %487 = vmatprep.subr.mxu0 0.0
    %488 = vmatpush1.msra.mxu0 0.0
    %489 = vmatprep.subr.mxu0 0.0
    %490 = vmatpush1.msra.mxu0 0.0
    %491 = vmatprep.subr.mxu0 0.0
    %492 = vmatpush1.msra.mxu0 0.0
    %493 = vmatprep.subr.mxu0 0.0
    %494 = vmatpush1.msra.mxu0 0.0
    %495 = vmatprep.subr.mxu0 0.0
    %496 = vmatpush1.msra.mxu0 0.0
    %497 = vmatprep.subr.mxu0 0.0
    %498 = vmatpush1.msra.mxu0 0.0
    %499 = vmatprep.subr.mxu0 0.0
    %500 = vmatpush1.msra.mxu0 0.0
    %501 = vmatprep.subr.mxu0 0.0
    %502 = vmatpush1.msra.mxu0 0.0
    %503 = vmatprep.subr.mxu0 0.0
    %504 = vmatpush1.msra.mxu0 0.0
    %505 = vmatprep.subr.mxu0 0.0
    %506 = vmatpush1.msra.mxu0 0.0
    %507 = vmatprep.subr.mxu0 0.0
    %508 = vmatpush1.msra.mxu0 0.0
    %509 = vmatprep.subr.mxu0 0.0
    %510 = vmatpush1.msra.mxu0 0.0
    %511 = vmatprep.subr.mxu0 0.0
    %512 = vmatpush1.msra.mxu0 0.0
    %513 = vmatprep.subr.mxu0 0.0
    %514 = vmatpush1.msra.mxu0 0.0
    %515 = vmatprep.subr.mxu0 0.0
    %516 = vmatpush1.msra.mxu0 0.0
    %517 = vmatprep.subr.mxu0 0.0
    %518 = vmatpush1.msra.mxu0 0.0
    %519 = vmatprep.subr.mxu0 0.0
    %520 = vmatpush1.msra.mxu0 0.0
    %521 = vmatprep.subr.mxu0 0.0
    %522 = vmatpush1.msra.mxu0 0.0
    %523 = vmatprep.subr.mxu0 0.0
    %524 = vmatpush1.msra.mxu0 0.0
    %525 = vmatprep.subr.mxu0 0.0
    %526 = vmatpush1.msra.mxu0 0.0
    %527 = vmatprep.subr.mxu0 0.0
    %528 = vmatpush1.msra.mxu0 0.0
    %529 = vmatprep.subr.mxu0 0.0
    %530 = vmatpush1.msra.mxu0 0.0
    %531 = vmatprep.subr.mxu0 0.0
    %532 = vmatpush1.msra.mxu0 0.0
    %533 = vmatprep.subr.mxu0 0.0
    %534 = vmatpush1.msra.mxu0 0.0
    %535 = vmatprep.subr.mxu0 0.0
    %536 = vmatpush1.msra.mxu0 0.0
    %537 = vmatprep.subr.mxu0 0.0
    %538 = vmatpush1.msra.mxu0 0.0
    %539 = vmatprep.subr.mxu0 0.0
    %540 = vmatpush1.msra.mxu0 0.0
    %541 = vmatprep.subr.mxu0 0.0
    %542 = vmatpush1.msra.mxu0 0.0
    %543 = vmatprep.mubr.f32.mxu0 0.0
    %544 = vmatmul.mubr.f32.gmra.mrb[0].mxu0 %v474
    %v545 = vpop.f32.mrb[0].mxu0
    %v546 = vadd.f32 %v459, %v545
    %v547 = vpop.f32.mrb[0].mxu0
    %548 = vmatprep.mubr.f32.mxu0 0.0
    %549 = vmatmul.mubr.f32.gmra.mrb[0].mxu0 %v477
    %v550 = vpop.f32.mrb[0].mxu0
    %v551 = vadd.f32 %v464, %v550
    %v552 = vpop.f32.mrb[0].mxu0
    %553 = vdwg.mxu0
    %v554 = vlaneseq
    %v555 = vshrl.u32 %v554, 7
    %v556 = vsub.s32 0, %v555
    %v557 = vrot.slane %v68, %v556
    %v558 = vadd.f32 %v546, %v557
    %v559 = vadd.f32 %v551, %v557
    %v560 = vadd.f32 %v56, %v558
    %v561 = vadd.f32 %v57, %v559
    %v562 = vsel %vm69, %v560, 0.0
    %563 = vadd.xlane.f32.xlu0 %v562
    %v564 = vpop.xlane.xlu0 %563
    %v565 = vsel %vm69, %v561, 0.0
    %566 = vadd.xlane.f32.xlu0 %v565
    %v567 = vpop.xlane.xlu0 %566
    %v568 = vrcp.pop 32.0
    %v569 = vmul.f32 %v564, %v568
    %v570 = vmul.f32 %v567, %v568
    %v571 = vsub.f32 %v560, %v569
    %v572 = vsub.f32 %v561, %v570
    %v573 = vmul.f32 %v571, %v571
    %v574 = vmul.f32 %v572, %v572
    %v575 = vsel %vm69, %v573, 0.0
    %576 = vadd.xlane.f32.xlu0 %v575
    %v577 = vpop.xlane.xlu0 %576
    %v578 = vsel %vm69, %v574, 0.0
    %579 = vadd.xlane.f32.xlu0 %v578
    %v580 = vpop.xlane.xlu0 %579
    %v581 = vmul.f32 %v577, %v568
    %v582 = vmul.f32 %v580, %v568
    %v583 = vadd.f32 %v581, 1e-06
    %v584 = vadd.f32 %v582, 1e-06
    %v585 = vrsqrt.pop %v583
    %v586 = vrsqrt.pop %v584
    %v587 = vmul.f32 %v571, %v585
    %v588 = vmul.f32 %v572, %v586
    %v589 = vlaneseq
    %v590 = vshrl.u32 %v589, 7
    %v591 = vsub.s32 1, %v590
    %v592 = vrot.slane %v68, %v591
    %v593 = vmul.f32 %v587, %v592
    %v594 = vmul.f32 %v588, %v592
    %v595 = vlaneseq
    %v596 = vshrl.u32 %v595, 7
    %v597 = vsub.s32 2, %v596
    %v598 = vrot.slane %v68, %v597
    %v599 = vadd.f32 %v593, %v598
    %v600 = vadd.f32 %v594, %v598
    %v601 = vlaneseq
    %v602 = vshrl.u32 %v601, 7
    %v603 = vsub.s32 6, %v602
    %v604 = vrot.slane %v68, %v603
    %v606 = vsel %vm69, %v599, 0
    %v609 = vsel %vm69, %v600, 0
    %611 = vmatprep.subr.mxu0 0.0
    %612 = vmatpush1.msra.mxu0 %v59
    %613 = vmatprep.subr.mxu0 0.0
    %614 = vmatpush1.msra.mxu0 %v61
    %615 = vmatprep.subr.mxu0 0.0
    %616 = vmatpush1.msra.mxu0 %v63
    %617 = vmatprep.subr.mxu0 0.0
    %618 = vmatpush1.msra.mxu0 %v65
    %619 = vmatprep.subr.mxu0 0.0
    %620 = vmatpush1.msra.mxu0 0.0
    %621 = vmatprep.subr.mxu0 0.0
    %622 = vmatpush1.msra.mxu0 0.0
    %623 = vmatprep.subr.mxu0 0.0
    %624 = vmatpush1.msra.mxu0 0.0
    %625 = vmatprep.subr.mxu0 0.0
    %626 = vmatpush1.msra.mxu0 0.0
    %627 = vmatprep.subr.mxu0 0.0
    %628 = vmatpush1.msra.mxu0 0.0
    %629 = vmatprep.subr.mxu0 0.0
    %630 = vmatpush1.msra.mxu0 0.0
    %631 = vmatprep.subr.mxu0 0.0
    %632 = vmatpush1.msra.mxu0 0.0
    %633 = vmatprep.subr.mxu0 0.0
    %634 = vmatpush1.msra.mxu0 0.0
    %635 = vmatprep.subr.mxu0 0.0
    %636 = vmatpush1.msra.mxu0 0.0
    %637 = vmatprep.subr.mxu0 0.0
    %638 = vmatpush1.msra.mxu0 0.0
    %639 = vmatprep.subr.mxu0 0.0
    %640 = vmatpush1.msra.mxu0 0.0
    %641 = vmatprep.subr.mxu0 0.0
    %642 = vmatpush1.msra.mxu0 0.0
    %643 = vmatprep.subr.mxu0 0.0
    %644 = vmatpush1.msra.mxu0 0.0
    %645 = vmatprep.subr.mxu0 0.0
    %646 = vmatpush1.msra.mxu0 0.0
    %647 = vmatprep.subr.mxu0 0.0
    %648 = vmatpush1.msra.mxu0 0.0
    %649 = vmatprep.subr.mxu0 0.0
    %650 = vmatpush1.msra.mxu0 0.0
    %651 = vmatprep.subr.mxu0 0.0
    %652 = vmatpush1.msra.mxu0 0.0
    %653 = vmatprep.subr.mxu0 0.0
    %654 = vmatpush1.msra.mxu0 0.0
    %655 = vmatprep.subr.mxu0 0.0
    %656 = vmatpush1.msra.mxu0 0.0
    %657 = vmatprep.subr.mxu0 0.0
    %658 = vmatpush1.msra.mxu0 0.0
    %659 = vmatprep.subr.mxu0 0.0
    %660 = vmatpush1.msra.mxu0 0.0
    %661 = vmatprep.subr.mxu0 0.0
    %662 = vmatpush1.msra.mxu0 0.0
    %663 = vmatprep.subr.mxu0 0.0
    %664 = vmatpush1.msra.mxu0 0.0
    %665 = vmatprep.subr.mxu0 0.0
    %666 = vmatpush1.msra.mxu0 0.0
    %667 = vmatprep.subr.mxu0 0.0
    %668 = vmatpush1.msra.mxu0 0.0
    %669 = vmatprep.subr.mxu0 0.0
    %670 = vmatpush1.msra.mxu0 0.0
    %671 = vmatprep.subr.mxu0 0.0
    %672 = vmatpush1.msra.mxu0 0.0
    %673 = vmatprep.subr.mxu0 0.0
    %674 = vmatpush1.msra.mxu0 0.0
    %675 = vmatprep.mubr.f32.mxu0 0.0
    %676 = vmatmul.mubr.f32.gmra.mrb[0].mxu0 %v606
    %v677 = vpop.f32.mrb[0].mxu0
    %v678 = vadd.f32 %v604, %v677
    %v679 = vpop.f32.mrb[0].mxu0
    %680 = vmatprep.mubr.f32.mxu0 0.0
    %681 = vmatmul.mubr.f32.gmra.mrb[0].mxu0 %v609
    %v682 = vpop.f32.mrb[0].mxu0
    %v683 = vadd.f32 %v604, %v682
    %v684 = vpop.f32.mrb[0].mxu0
    %685 = vdwg.mxu0
    %v686 = vmax.f32 %v678, 0.0
    %v687 = vmax.f32 %v683, 0.0
    %v688 = vlaneseq
    %v689 = vshrl.u32 %v688, 7
    %v690 = vsub.s32 3, %v689
    %v691 = vrot.slane %v68, %v690
    %696 = vrot.lane.b32.xlu0 %v59, 64
    %v697 = vpop.permute.xlu0 %696
    %698 = vrot.lane.b32.xlu0 %v61, 64
    %v699 = vpop.permute.xlu0 %698
    %700 = vrot.lane.b32.xlu0 %v63, 64
    %v701 = vpop.permute.xlu0 %700
    %702 = vrot.lane.b32.xlu0 %v65, 64
    %v703 = vpop.permute.xlu0 %702
    %vm704 = vcmask 523264
    %v706 = vsel %vm704, %v686, 0
    %v709 = vsel %vm704, %v687, 0
    %v711 = vsel %vm704, %v697, 0
    %v713 = vsel %vm704, %v699, 0
    %v715 = vsel %vm704, %v701, 0
    %v717 = vsel %vm704, %v703, 0
    %719 = vmatprep.subr.mxu0 0.0
    %720 = vmatpush1.xpose.msra.mxu0 %v711
    %721 = vmatprep.subr.mxu0 0.0
    %722 = vmatpush1.xpose.msra.mxu0 %v713
    %723 = vmatprep.subr.mxu0 0.0
    %724 = vmatpush1.xpose.msra.mxu0 %v715
    %725 = vmatprep.subr.mxu0 0.0
    %726 = vmatpush1.xpose.msra.mxu0 %v717
    %727 = vmatprep.subr.mxu0 0.0
    %728 = vmatpush1.xpose.msra.mxu0 0.0
    %729 = vmatprep.subr.mxu0 0.0
    %730 = vmatpush1.xpose.msra.mxu0 0.0
    %731 = vmatprep.subr.mxu0 0.0
    %732 = vmatpush1.xpose.msra.mxu0 0.0
    %733 = vmatprep.subr.mxu0 0.0
    %734 = vmatpush1.xpose.msra.mxu0 0.0
    %735 = vmatprep.subr.mxu0 0.0
    %736 = vmatpush1.xpose.msra.mxu0 0.0
    %737 = vmatprep.subr.mxu0 0.0
    %738 = vmatpush1.xpose.msra.mxu0 0.0
    %739 = vmatprep.subr.mxu0 0.0
    %740 = vmatpush1.xpose.msra.mxu0 0.0
    %741 = vmatprep.subr.mxu0 0.0
    %742 = vmatpush1.xpose.msra.mxu0 0.0
    %743 = vmatprep.subr.mxu0 0.0
    %744 = vmatpush1.xpose.msra.mxu0 0.0
    %745 = vmatprep.subr.mxu0 0.0
    %746 = vmatpush1.xpose.msra.mxu0 0.0
    %747 = vmatprep.subr.mxu0 0.0
    %748 = vmatpush1.xpose.msra.mxu0 0.0
    %749 = vmatprep.subr.mxu0 0.0
    %750 = vmatpush1.xpose.msra.mxu0 0.0
    %751 = vmatprep.subr.mxu0 0.0
    %752 = vmatpush1.xpose.msra.mxu0 0.0
    %753 = vmatprep.subr.mxu0 0.0
    %754 = vmatpush1.xpose.msra.mxu0 0.0
    %755 = vmatprep.subr.mxu0 0.0
    %756 = vmatpush1.xpose.msra.mxu0 0.0
    %757 = vmatprep.subr.mxu0 0.0
    %758 = vmatpush1.xpose.msra.mxu0 0.0
    %759 = vmatprep.subr.mxu0 0.0
    %760 = vmatpush1.xpose.msra.mxu0 0.0
    %761 = vmatprep.subr.mxu0 0.0
    %762 = vmatpush1.xpose.msra.mxu0 0.0
    %763 = vmatprep.subr.mxu0 0.0
    %764 = vmatpush1.xpose.msra.mxu0 0.0
    %765 = vmatprep.subr.mxu0 0.0
    %766 = vmatpush1.xpose.msra.mxu0 0.0
    %767 = vmatprep.subr.mxu0 0.0
    %768 = vmatpush1.xpose.msra.mxu0 0.0
    %769 = vmatprep.subr.mxu0 0.0
    %770 = vmatpush1.xpose.msra.mxu0 0.0
    %771 = vmatprep.subr.mxu0 0.0
    %772 = vmatpush1.xpose.msra.mxu0 0.0
    %773 = vmatprep.subr.mxu0 0.0
    %774 = vmatpush1.xpose.msra.mxu0 0.0
    %775 = vmatprep.subr.mxu0 0.0
    %776 = vmatpush1.xpose.msra.mxu0 0.0
    %777 = vmatprep.subr.mxu0 0.0
    %778 = vmatpush1.xpose.msra.mxu0 0.0
    %779 = vmatprep.subr.mxu0 0.0
    %780 = vmatpush1.xpose.msra.mxu0 0.0
    %781 = vmatprep.subr.mxu0 0.0
    %782 = vmatpush1.xpose.msra.mxu0 0.0
    %783 = vmatprep.mubr.f32.mxu0 0.0
    %784 = vmatmul.mubr.f32.gmra.mrb[0].mxu0 %v706
    %v785 = vpop.f32.mrb[0].mxu0
    %v786 = vadd.f32 %v691, %v785
    %v787 = vpop.f32.mrb[0].mxu0
    %788 = vmatprep.mubr.f32.mxu0 0.0
    %789 = vmatmul.mubr.f32.gmra.mrb[0].mxu0 %v709
    %v790 = vpop.f32.mrb[0].mxu0
    %v791 = vadd.f32 %v691, %v790
    %v792 = vpop.f32.mrb[0].mxu0
    %793 = vdwg.mxu0
    %v794 = vadd.f32 %v599, %v786
    %v795 = vadd.f32 %v600, %v791
    %v796 = vsel %vm69, %v794, 0.0
    %797 = vadd.xlane.f32.xlu0 %v796
    %v798 = vpop.xlane.xlu0 %797
    %v799 = vsel %vm69, %v795, 0.0
    %800 = vadd.xlane.f32.xlu0 %v799
    %v801 = vpop.xlane.xlu0 %800
    %v802 = vmul.f32 %v798, %v568
    %v803 = vmul.f32 %v801, %v568
    %v804 = vsub.f32 %v794, %v802
    %v805 = vsub.f32 %v795, %v803
    %v806 = vmul.f32 %v804, %v804
    %v807 = vmul.f32 %v805, %v805
    %v808 = vsel %vm69, %v806, 0.0
    %809 = vadd.xlane.f32.xlu0 %v808
    %v810 = vpop.xlane.xlu0 %809
    %v811 = vsel %vm69, %v807, 0.0
    %812 = vadd.xlane.f32.xlu0 %v811
    %v813 = vpop.xlane.xlu0 %812
    %v814 = vmul.f32 %v810, %v568
    %v815 = vmul.f32 %v813, %v568
    %v816 = vadd.f32 %v814, 1e-06
    %v817 = vadd.f32 %v815, 1e-06
    %v818 = vrsqrt.pop %v816
    %v819 = vrsqrt.pop %v817
    %v820 = vmul.f32 %v804, %v818
    %v821 = vmul.f32 %v805, %v819
    %v822 = vlaneseq
    %v823 = vshrl.u32 %v822, 7
    %v824 = vsub.s32 4, %v823
    %v825 = vrot.slane %v68, %v824
    %v826 = vmul.f32 %v820, %v825
    %v827 = vmul.f32 %v821, %v825
    %v828 = vlaneseq
    %v829 = vshrl.u32 %v828, 7
    %v830 = vsub.s32 5, %v829
    %v831 = vrot.slane %v68, %v830
    %v832 = vadd.f32 %v826, %v831
    %v833 = vadd.f32 %v827, %v831
    %834 = vst.msk [vmem:[#allocation8] sm:$0xff] %vm69, %v832
    %835 = vst.msk [vmem:[#allocation8 + $0x8] sm:$0xff] %vm69, %v833
    // Predicated region
    $region26: #{encoder_layer.1} parent=1 // pred_check
      _
    $region27: #{encoder_layer.1} parent=1 // pred_check_branch
      %837 = sbr.rel (0) target = $region29
    $region28: #{encoder_layer.1} parent=1 // pred_region
      %s839 = ssub.s32 256, 256
      %840 = vsyncadd [#allocation4], %s839
      %s841 = sshll.u32 [#allocation8], 4
      %s842 = int_to_ptr.vmem [resolvable:$true] %s841
      %847 = dma.vmem_to_hbm [thread:$0]  %s842, 256, %s3, [#allocation4], 128, 128, 8
    $region29: #{encoder_layer.1} parent=1 // pred_fallthru
      _
    // Predicated region
    $region30: #{encoder_layer.1} parent=1 // pred_check
      _
    $region31: #{encoder_layer.1} parent=1 // pred_check_branch
      %849 = sbr.rel (0) target = $region33
    $region32: #{encoder_layer.1} parent=1 // pred_region
      %850 = dma.done [#allocation4], 256
    $region33: #{encoder_layer.1} parent=1 // pred_fallthru
      _
    %851 = vsyncpa [#allocation3], 1
    %852 = vsyncpa [#allocation6], 1
    %853 = vsyncpa [#allocation4], 1

</llo_original>
